<compile_context>
chip_gen: v7x
topology: tpu7x:2x2x1
jax: 0.10.0
libtpu: 0.0.40
codegen_flags: <defaults>
</compile_context>

<pallas_src>
import functools

import numpy as np
import jax
import jax.numpy as jnp
from jax.experimental import pallas as pl
from jax.experimental.pallas import tpu as pltpu


def _build_pe_table(d_model: int, max_len: int) -> jnp.ndarray:
    """Sin/cos positional encoding table, shape (max_len, d_model).

    Equivalent to the torch buffer's pe[:, 0, :] (the batch-singleton dim is
    dropped; it is re-broadcast inside the kernel). Also fixes the latent
    odd-d_model shape bug present in the PyTorch original.
    """
    position = np.arange(0, max_len, dtype=np.float32)[:, None]          # (max_len, 1)
    div_term = np.exp(
        np.arange(0, d_model, 2, dtype=np.float32) * (-np.log(10000.0) / d_model)
    )                                                                    # (ceil(d/2),)
    pe = np.zeros((max_len, d_model), dtype=np.float32)
    pe[:, 0::2] = np.sin(position * div_term)
    pe[:, 1::2] = np.cos(position * div_term[: d_model // 2])
    return jnp.asarray(pe)


def _pos_enc_kernel(x_ref, pe_ref, o_ref, *, batch: int, d_model: int):
    # x_ref / o_ref: (ts, B*D) in VMEM (lane-dense trailing dim)
    # pe_ref:        (ts, D)   in VMEM, same dtype as x.
    pe = pe_ref[...]                       # loaded once per tile, reused below
    if batch == 1:
        o_ref[...] = x_ref[...] + pe
    else:
        # Static unrolled loop over the batch fold: lane slices only, no
        # (ts, B*D) tiled intermediate, pe vregs stay live and are reused.
        for b in range(batch):
            sl = pl.ds(b * d_model, d_model)   # static start/size -> aligned slices
            o_ref[:, sl] = x_ref[:, sl] + pe


def _vmem_capacity_bytes() -> int:
    """Physical VMEM per core; conservative 64 MiB (v7x) fallback."""
    try:
        return int(pltpu.get_tpu_info().vmem_capacity_bytes)
    except Exception:
        return 64 * 1024 * 1024


def positional_encoding_forward(
    x: jnp.ndarray,
    pe: jnp.ndarray,
    *,
    donate_x: bool = False,
) -> jnp.ndarray:
    """x: (seq_len, batch, d_model); pe: (max_len, d_model). Eval-mode forward."""
    S, B, D = x.shape
    max_len, d_model = pe.shape
    assert d_model == D and S <= max_len

    # Pre-cast pe to x.dtype on the host: halves pe HBM/VMEM traffic when x is
    # bf16 and keeps the in-kernel add in the native dtype.
    pe = pe.astype(x.dtype)
    itemsize = x.dtype.itemsize

    x2 = x.reshape(S, B * D)  # free contiguous view; trailing dim lane-dense

    # Chip-aware VMEM sizing: big tiles amortize the ~0.35 us per-grid-step
    # overhead on v5e/v6e (128 MiB VMEM), while staying under v7x's 64 MiB.
    vmem_phys = _vmem_capacity_bytes()
    vmem_limit = min((vmem_phys * 3) // 4, 100 * 1024 * 1024)
    vmem_budget = (vmem_limit * 3) // 4

    # Double-buffered working set per seq row (no in-kernel intermediate):
    #   2 buffers * (x-in + x-out) + 2 buffers * pe-in, all in x.dtype.
    row_bytes = 2 * (2 * B * D + D) * itemsize

    # Sublane packing granularity: 8 for f32, 16 for bf16, 32 for int8/fp8.
    mult = max(8, 32 // itemsize)
    s_pad = ((S + mult - 1) // mult) * mult

    ts = vmem_budget // max(row_bytes, 1)
    ts = max(mult, min(ts, 2048))
    ts = (ts // mult) * mult
    ts = min(ts, s_pad)                 # don't tile past the (padded) seq length

    # Guarantee >=2 independent seq tiles when possible so both v7x
    # TensorCores get work under dimension_semantics=("parallel",).
    if pl.cdiv(S, ts) == 1 and s_pad > mult:
        half = (s_pad + 1) // 2
        ts = max(mult, ((half + mult - 1) // mult) * mult)
        ts = min(ts, s_pad)

    grid = (pl.cdiv(S, ts),)

    kernel = functools.partial(_pos_enc_kernel, batch=B, d_model=D)

    out2 = pl.pallas_call(
        kernel,
        out_shape=jax.ShapeDtypeStruct((S, B * D), x.dtype),
        grid=grid,
        in_specs=[
            pl.BlockSpec((ts, B * D), lambda i: (i, 0)),
            # index directly into the full pe buffer -> no pe[:S] HBM copy
            pl.BlockSpec((ts, D), lambda i: (i, 0)),
        ],
        out_specs=pl.BlockSpec((ts, B * D), lambda i: (i, 0)),
        input_output_aliases=({0: 0} if donate_x else {}),
        compiler_params=pltpu.CompilerParams(
            dimension_semantics=("parallel",),   # seq tiles are independent
            vmem_limit_bytes=int(vmem_limit),
        ),
        cost_estimate=pl.CostEstimate(
            flops=S * B * D,
            transcendentals=0,
            bytes_accessed=(2 * S * B * D + S * D) * itemsize,
        ),
    )(x2, pe)

    return out2.reshape(S, B, D)


if __name__ == "__main__":
    d_model = 64          # B*D = 128 -> lane-dense output stores
    max_len = 64
    seq_len = 8
    batch = 2

    key = jax.random.PRNGKey(0)
    x = jax.random.normal(key, (seq_len, batch, d_model), dtype=jnp.float32)

    pe = _build_pe_table(d_model, max_len)

    out = positional_encoding_forward(x, pe)
    out = jax.block_until_ready(out)

    # Reference check in plain JAX (eval-mode dropout == identity)
    ref = x + pe[:seq_len][:, None, :]
    np.testing.assert_allclose(np.asarray(out), np.asarray(ref), rtol=1e-6, atol=1e-6)

    print("KERNEL_OK")
</pallas_src>

<mosaic_0001>
module attributes {stable_mosaic.version = 11 : i64} {
  func.func @_pos_enc_kernel(%arg0: i32, %arg1: memref<8x128xf32, #tpu.memory_space<vmem>>, %arg2: memref<8x64xf32, #tpu.memory_space<vmem>>, %arg3: memref<8x128xf32, #tpu.memory_space<vmem>>) attributes {dimension_semantics = [#tpu.dimension_semantics<parallel>], iteration_bounds = array<i64: 1>, scalar_prefetch = 0 : i64, scratch_operands = 0 : i64, tpu.core_type = #tpu.core_type<tc>, window_params = [{transform_indices = @transform_0, window_bounds = array<i64: 8, 128>}, {transform_indices = @transform_1, window_bounds = array<i64: 8, 64>}, {transform_indices = @transform_2, window_bounds = array<i64: 8, 128>}]} {
    %c0 = arith.constant 0 : index
    %c0_0 = arith.constant 0 : index
    %0 = vector.load %arg2[%c0, %c0_0] : memref<8x64xf32, #tpu.memory_space<vmem>>, vector<8x64xf32>
    %c0_1 = arith.constant 0 : index
    %c0_2 = arith.constant 0 : index
    %1 = vector.load %arg1[%c0_1, %c0_2] : memref<8x128xf32, #tpu.memory_space<vmem>>, vector<8x64xf32>
    %2 = arith.addf %1, %0 : vector<8x64xf32>
    %c0_3 = arith.constant 0 : index
    %c0_4 = arith.constant 0 : index
    %3 = vector.load %arg3[%c0_3, %c0_4] : memref<8x128xf32, #tpu.memory_space<vmem>>, vector<8x64xf32>
    tpu.vector_store %arg3[%c0_3, %c0_4], %2 {strides = array<i32>} : memref<8x128xf32, #tpu.memory_space<vmem>>, vector<8x64xf32>,
    %c0_5 = arith.constant 0 : index
    %c64 = arith.constant 64 : index
    %4 = vector.load %arg1[%c0_5, %c64] : memref<8x128xf32, #tpu.memory_space<vmem>>, vector<8x64xf32>
    %5 = arith.addf %4, %0 : vector<8x64xf32>
    %c0_6 = arith.constant 0 : index
    %c64_7 = arith.constant 64 : index
    %6 = vector.load %arg3[%c0_6, %c64_7] : memref<8x128xf32, #tpu.memory_space<vmem>>, vector<8x64xf32>
    tpu.vector_store %arg3[%c0_6, %c64_7], %5 {strides = array<i32>} : memref<8x128xf32, #tpu.memory_space<vmem>>, vector<8x64xf32>,
    return
  }
  func.func @transform_0(%arg0: i32) -> (i32, i32) {
    %c0_i32 = arith.constant 0 : i32
    %c0_i32_0 = arith.constant 0 : i32
    return %arg0, %c0_i32 : i32, i32
  }
  func.func @transform_1(%arg0: i32) -> (i32, i32) {
    %c0_i32 = arith.constant 0 : i32
    %c0_i32_0 = arith.constant 0 : i32
    return %arg0, %c0_i32 : i32, i32
  }
  func.func @transform_2(%arg0: i32) -> (i32, i32) {
    %c0_i32 = arith.constant 0 : i32
    %c0_i32_0 = arith.constant 0 : i32
    return %arg0, %c0_i32 : i32, i32
  }
}

</mosaic_0001>

<llo_original>
// kernel: tpu_custom_call.1
$region0: #{tpu_custom_call.1}
  #allocation0 [shape = 'u32[]', space=smem, size = 0x4, offset = 0x4, fixed_abs, tag = 'smem constant byte address 0x4 - core index']
  #allocation1 [shape = 'u32[144,128]{1,0:T(1,128)}', space=vmem, size = 0x12000, scoped, tag = 'internal scratch']
  %s0 = inlined_call_operand.hbm [shape: f32[8,128], index: 0, kind: input, shape index: {}]
  %s1 = inlined_call_operand.hbm [shape: f32[64,64], index: 1, kind: input, shape index: {}]
  %s2 = inlined_call_operand.hbm [shape: f32[8,128], index: 2, kind: output, shape index: {}]
  %s3 = sld [smem:[#allocation0]]
  $region26: #{tpu_custom_call.1} parent=0
    _
  %s5 = ssub.s32 1, %s3
  %s6 = scalar_select 0, %s5, %s3
  $region1: #{tpu_custom_call.1} parent=0
    #allocation2 [shape = 'u8[4096]{0}', space=vmem, size = 0x1000, scoped, tag = 'input window, operand 0, single buffered']
    #allocation3 [shape = 's32[1]{0}', space=sflag, size = 0x4, scoped, tag = 'scoped memory for tpu_custom_call.1']
    #allocation4 [shape = 's32[1]{0}', space=sflag, size = 0x4, scoped, tag = 'scoped memory for tpu_custom_call.1']
    #allocation5 [shape = 'u8[4096]{0}', space=vmem, size = 0x1000, scoped, tag = 'input window, operand 1, single buffered']
    #allocation6 [shape = 's32[1]{0}', space=sflag, size = 0x4, scoped, tag = 'scoped memory for tpu_custom_call.1']
    #allocation7 [shape = 'u8[4096]{0}', space=vmem, size = 0x1000, scoped, tag = 'output window, operand 0, single buffered']
    %7 = vsyncpa [#allocation3], 0
    %8 = vsyncpa [#allocation6], 0
    %9 = vsyncpa [#allocation4], 0
    // Predicated region
    $region2: #{tpu_custom_call.1} parent=1 // pred_check
      _
    $region3: #{tpu_custom_call.1} parent=1 // pred_check_branch
      %11 = sbr.rel (0) target = $region5
    $region4: #{tpu_custom_call.1} parent=1 // pred_region
      %s13 = ssub.s32 128, 128
      %14 = vsyncadd [#allocation3], %s13
      %s16 = sshll.u32 [#allocation2], 4
      %s17 = int_to_ptr.vmem [resolvable:$true] %s16
      %19 = dma.hbm_to_vmem [thread:$0]  %s0, 128, %s17, [#allocation3]
    $region5: #{tpu_custom_call.1} parent=1 // pred_fallthru
      _
    // Predicated region
    $region6: #{tpu_custom_call.1} parent=1 // pred_check
      _
    $region7: #{tpu_custom_call.1} parent=1 // pred_check_branch
      %21 = sbr.rel (0) target = $region9
    $region8: #{tpu_custom_call.1} parent=1 // pred_region
      %s23 = ssub.s32 128, 128
      %24 = vsyncadd [#allocation6], %s23
      %s26 = sshll.u32 [#allocation5], 4
      %s27 = int_to_ptr.vmem [resolvable:$true] %s26
      %29 = dma.hbm_to_vmem [thread:$0]  %s1, 128, %s27, [#allocation6]
    $region9: #{tpu_custom_call.1} parent=1 // pred_fallthru
      _
    // Predicated region
    $region10: #{tpu_custom_call.1} parent=1 // pred_check
      _
    $region11: #{tpu_custom_call.1} parent=1 // pred_check_branch
      %31 = sbr.rel (0) target = $region13
    $region12: #{tpu_custom_call.1} parent=1 // pred_region
      %32 = dma.done [#allocation3], 128
    $region13: #{tpu_custom_call.1} parent=1 // pred_fallthru
      _
    // Predicated region
    $region14: #{tpu_custom_call.1} parent=1 // pred_check
      _
    $region15: #{tpu_custom_call.1} parent=1 // pred_check_branch
      %34 = sbr.rel (0) target = $region17
    $region16: #{tpu_custom_call.1} parent=1 // pred_region
      %35 = dma.done [#allocation6], 128
    $region17: #{tpu_custom_call.1} parent=1 // pred_fallthru
      _
    %v36 = vld [vmem:[#allocation5] sm:$0xff]
    %v37 = vld [vmem:[#allocation2] sm:$0xff]
    %v38 = vadd.f32 %v37, %v36
    %vm39 = vcmask 523264
    %40 = vst.msk [vmem:[#allocation7] sm:$0xff] %vm39, %v38
    %v41 = vld [vmem:[#allocation2] sm:$0xff]
    %43 = vrot.lane.b32.xlu0 %v36, 64
    %v44 = vpop.permute.xlu0 %43
    %v46 = vadd.f32 %v41, %v44
    %vm47 = vcmask 1048064
    %48 = vst.msk [vmem:[#allocation7] sm:$0xff] %vm47, %v46
    // Predicated region
    $region18: #{tpu_custom_call.1} parent=1 // pred_check
      _
    $region19: #{tpu_custom_call.1} parent=1 // pred_check_branch
      %50 = sbr.rel (0) target = $region21
    $region20: #{tpu_custom_call.1} parent=1 // pred_region
      %s52 = ssub.s32 128, 128
      %53 = vsyncadd [#allocation4], %s52
      %s55 = sshll.u32 [#allocation7], 4
      %s56 = int_to_ptr.vmem [resolvable:$true] %s55
      %58 = dma.vmem_to_hbm [thread:$0]  %s56, 128, %s2, [#allocation4]
    $region21: #{tpu_custom_call.1} parent=1 // pred_fallthru
      _
    // Predicated region
    $region22: #{tpu_custom_call.1} parent=1 // pred_check
      _
    $region23: #{tpu_custom_call.1} parent=1 // pred_check_branch
      %60 = sbr.rel (0) target = $region25
    $region24: #{tpu_custom_call.1} parent=1 // pred_region
      %61 = dma.done [#allocation4], 128
    $region25: #{tpu_custom_call.1} parent=1 // pred_fallthru
      _
    %62 = vsyncpa [#allocation3], 1
    %63 = vsyncpa [#allocation6], 1
    %64 = vsyncpa [#allocation4], 1

</llo_original>
